<compile_context>
chip_gen: v7x
topology: tpu7x:2x2x1
jax: 0.10.0
libtpu: 0.0.40
codegen_flags: <defaults>
</compile_context>

<pallas_src>
import math
import numpy as np
import jax
import jax.numpy as jnp
from jax import lax
from jax.experimental import pallas as pl
from jax.experimental.pallas import tpu as pltpu

_LANE = 128        # lane width: last dim of every tile
_SB_TARGET = 256   # sublane rows per tile -> 256*128 = 32768 elems (128 KiB f32)


def _round_up(x, m):
    return (x + m - 1) // m * m


# --------------------- counter-based RNG (Threefry-2x32) -------------------- #
# All arithmetic is int32 (two's complement add/xor/shift are bit-identical to
# the uint32 reference; logical right shift is emulated with shift+mask), which
# keeps every op on the well-supported i32 VPU path and works in interpret mode.

def _rotl32(x, r):
    """Rotate-left of 32-bit patterns held in int32."""
    return (x << np.int32(r)) | ((x >> np.int32(32 - r)) & np.int32((1 << r) - 1))


def _threefry2x32(k0, k1, x0, x1):
    """Threefry-2x32, 20 rounds (same schedule as jax.random's threefry)."""
    rot = ((13, 15, 26, 6), (17, 29, 16, 24))
    ks = (k0, k1, k0 ^ k1 ^ np.int32(0x1BD11BDA))
    x0 = x0 + ks[0]
    x1 = x1 + ks[1]
    for block in range(5):
        for r in rot[block % 2]:
            x0 = x0 + x1
            x1 = _rotl32(x1, r)
            x1 = x1 ^ x0
        x0 = x0 + ks[(block + 1) % 3]
        x1 = x1 + ks[(block + 2) % 3] + np.int32(block + 1)
    return x0, x1


def _bits_to_open_unit(bits):
    """Random 32-bit pattern -> f32 uniform on the OPEN interval (0,1); log-safe."""
    b24 = (bits >> np.int32(8)) & np.int32((1 << 24) - 1)   # top 24 bits, >= 0
    return (b24.astype(jnp.float32) + np.float32(0.5)) * np.float32(1.0 / (1 << 24))


def _sin_0_halfpi(y):
    """sin(y) for y in [0, pi/2] (degree-11 Taylor, |err| < 6e-8); pure VPU ops."""
    y2 = y * y
    p = np.float32(-1.0 / 39916800.0)
    p = p * y2 + np.float32(1.0 / 362880.0)
    p = p * y2 + np.float32(-1.0 / 5040.0)
    p = p * y2 + np.float32(1.0 / 120.0)
    p = p * y2 + np.float32(-1.0 / 6.0)
    p = p * y2 + np.float32(1.0)
    return y * p


# --------------------------------- kernel ----------------------------------- #
def _make_chi_noise_kernel(sb, has_gfactor):
    n_elems = sb * _LANE
    shape = (1, sb, _LANE)

    def kernel(seed_ref, npairs_ref, sig2_ref, img_ref, *rest):
        if has_gfactor:
            gf_ref, out_ref = rest
        else:
            gf_ref, out_ref = None, rest[0]

        r = pl.program_id(0)              # batch*channel row
        j = pl.program_id(1)              # spatial block
        nblk = pl.num_programs(1)

        npairs = npairs_ref[r]            # i32 scalar from SMEM (loop bound)

        # Unique per-(element, draw) counters; key depends only on the seed, so
        # streams never overlap across tiles or nearby seed values.
        row = lax.broadcasted_iota(jnp.int32, shape, 1)
        col = lax.broadcasted_iota(jnp.int32, shape, 2)
        ctr0 = (r * nblk + j) * n_elems + row * _LANE + col
        k0 = seed_ref[0]
        k1 = k0 ^ np.int32(0x243F6A88)

        # Base draw Z^2:  Z^2 == (-2 ln U1) * B with B ~ Beta(1/2,1/2), and B is
        # sampled exactly as sin(pi/2 * U2)^2  (no cos, no extra sqrt needed).
        b0, b1 = _threefry2x32(k0, k1, ctr0, np.int32(0))
        u1 = _bits_to_open_unit(b0)
        u2 = _bits_to_open_unit(b1)
        s = _sin_0_halfpi(np.float32(math.pi / 2.0) * u2)
        acc = np.float32(-2.0) * jnp.log(u1) * (s * s)

        # Each kept pair of squared normals contributes chi^2(2) = -2 ln(U).
        def body(i, acc):
            p0, _ = _threefry2x32(k0, k1, ctr0, i + np.int32(1))
            return acc - np.float32(2.0) * jnp.log(_bits_to_open_unit(p0))

        acc = lax.fori_loop(0, npairs, body, acc)

        # sigma^2 hoisted out of the accumulation; one sqrt at the end.
        noise = jnp.sqrt(acc * sig2_ref[...])
        if gf_ref is not None:
            noise = noise * gf_ref[...].astype(jnp.float32)
        out_ref[...] = (img_ref[...].astype(jnp.float32) + noise).astype(out_ref.dtype)

    return kernel


# --------------------------------- wrapper ---------------------------------- #
def random_chi_noise(image, sigma=1.0, ncoils=1, gfactor=None, seed=0):
    """Pallas TPU implementation of RandomChiNoise.forward(image, gfactor)."""
    image = jnp.asarray(image)
    N, C = int(image.shape[0]), int(image.shape[1])
    spatial = tuple(int(s) for s in image.shape[2:])
    L = int(np.prod(spatial)) if spatial else 1
    R = N * C

    sigma_c = np.broadcast_to(np.asarray(sigma, np.float32).reshape(-1), (C,))
    ncoils_c = np.broadcast_to(np.asarray(ncoils, np.int64).reshape(-1), (C,))
    nmax = int(ncoils_c.max())

    # Upstream (as written): extra draw n is KEPT for channel c iff
    # n >= 2*ncoils[c] + 1, so kept count = 2*max(0, nmax - ncoils[c] - 1)
    # (always even); with the base draw, dof is odd => exactly one Z^2 term
    # plus `npairs` chi^2(2) terms.
    npairs_c = np.maximum(0, nmax - ncoils_c - 1).astype(np.int32)

    sigma2_row = jnp.asarray(np.tile(sigma_c ** 2, N), jnp.float32).reshape(R, 1, 1)
    npairs_row = jnp.asarray(np.tile(npairs_c, N), jnp.int32)
    seed_arr = jnp.asarray([int(seed)], jnp.int32)

    # Lane/sublane-dense layout: per row, spatial -> (rows, 128); rows padded so
    # (sb, 128) tiles divide evenly.  Padded tail is computed and then trimmed.
    s_rows = max(1, -(-L // _LANE))
    sb = min(_SB_TARGET, _round_up(s_rows, 8))
    s_rows_pad = _round_up(s_rows, sb)
    l_pad = s_rows_pad * _LANE
    nblk = s_rows_pad // sb

    img2d = image.reshape(R, L)                      # native dtype, no f32 upcast
    if l_pad != L:
        img2d = jnp.pad(img2d, ((0, 0), (0, l_pad - L)))
    img3d = img2d.reshape(R, s_rows_pad, _LANE)

    tile_spec = pl.BlockSpec((1, sb, _LANE), lambda r, j, *_: (r, j, 0))
    sig_spec = pl.BlockSpec((1, 1, 1), lambda r, j, *_: (r, 0, 0))

    has_gf = gfactor is not None
    operands = [seed_arr, npairs_row, sigma2_row, img3d]
    in_specs = [sig_spec, tile_spec]
    if has_gf:
        gf2d = jnp.broadcast_to(jnp.asarray(gfactor, jnp.float32),
                                image.shape).reshape(R, L)
        if l_pad != L:
            gf2d = jnp.pad(gf2d, ((0, 0), (0, l_pad - L)))
        operands.append(gf2d.reshape(R, s_rows_pad, _LANE))
        in_specs.append(tile_spec)

    out3d = pl.pallas_call(
        _make_chi_noise_kernel(sb, has_gf),
        out_shape=jax.ShapeDtypeStruct((R, s_rows_pad, _LANE), image.dtype),
        grid_spec=pltpu.PrefetchScalarGridSpec(
            num_scalar_prefetch=2,
            grid=(R, nblk),
            in_specs=in_specs,
            out_specs=tile_spec,
        ),
        compiler_params=pltpu.CompilerParams(
            dimension_semantics=("parallel", "parallel")),
    )(*operands)

    out = out3d.reshape(R, l_pad)[:, :L]
    return out.reshape(image.shape)


# ---------------------------------- driver ---------------------------------- #
if __name__ == "__main__":
    key = jax.random.PRNGKey(0)
    N, C, H, W = 2, 4, 16, 16
    image = jax.random.normal(key, (N, C, H, W), dtype=jnp.float32)

    # deterministic per-channel module parameters
    sigma = np.array([1.0, 0.5, 2.0, 1.5], np.float32)
    ncoils = np.array([1, 2, 1, 3], np.int32)

    out = random_chi_noise(image, sigma=sigma, ncoils=ncoils, gfactor=None, seed=0)
    out = jax.block_until_ready(out)

    assert out.shape == image.shape and out.dtype == image.dtype
    noise = out - image
    assert bool(jnp.all(jnp.isfinite(out)))
    assert bool(jnp.all(noise >= 0.0))      # chi noise is non-negative

    print("KERNEL_OK")
</pallas_src>

<mosaic_0001>
module attributes {stable_mosaic.version = 11 : i64} {
  func.func @kernel(%arg0: i32, %arg1: i32, %arg2: memref<1xi32, #tpu.memory_space<smem>>, %arg3: memref<8xi32, #tpu.memory_space<smem>>, %arg4: memref<1x1x1xf32, #tpu.memory_space<vmem>>, %arg5: memref<1x8x128xf32, #tpu.memory_space<vmem>>, %arg6: memref<1x8x128xf32, #tpu.memory_space<vmem>>) attributes {dimension_semantics = [#tpu.dimension_semantics<parallel>, #tpu.dimension_semantics<parallel>], iteration_bounds = array<i64: 8, 1>, scalar_prefetch = 2 : i64, scratch_operands = 0 : i64, tpu.core_type = #tpu.core_type<tc>, window_params = [{transform_indices = @transform_0, window_bounds = array<i64: 1, 1, 1>}, {transform_indices = @transform_1, window_bounds = array<i64: 1, 8, 128>}, {transform_indices = @transform_2, window_bounds = array<i64: 1, 8, 128>}]} {
    %0 = arith.index_cast %arg0 : i32 to index
    %1 = memref.load %arg3[%0] : memref<8xi32, #tpu.memory_space<smem>>
    %2 = tpu.iota {dimensions = array<i32: 1>} : vector<1x8x128xi32>
    %3 = tpu.iota {dimensions = array<i32: 2>} : vector<1x8x128xi32>
    %c1_i32 = arith.constant 1 : i32
    %4 = arith.muli %arg0, %c1_i32 : i32
    %5 = arith.addi %4, %arg1 : i32
    %c1024_i32 = arith.constant 1024 : i32
    %6 = arith.muli %5, %c1024_i32 : i32
    %c128_i32 = arith.constant 128 : i32
    %7 = vector.broadcast %c128_i32 : i32 to vector<1x8x128xi32>
    %8 = arith.muli %2, %7 : vector<1x8x128xi32>
    %9 = vector.broadcast %6 : i32 to vector<1x8x128xi32>
    %10 = arith.addi %9, %8 : vector<1x8x128xi32>
    %11 = arith.addi %10, %3 : vector<1x8x128xi32>
    %c0 = arith.constant 0 : index
    %12 = memref.load %arg2[%c0] : memref<1xi32, #tpu.memory_space<smem>>
    %c608135816_i32 = arith.constant 608135816 : i32
    %13 = arith.xori %12, %c608135816_i32 : i32
    %14 = arith.xori %12, %13 : i32
    %c466688986_i32 = arith.constant 466688986 : i32
    %15 = arith.xori %14, %c466688986_i32 : i32
    %16 = vector.broadcast %12 : i32 to vector<1x8x128xi32>
    %17 = arith.addi %11, %16 : vector<1x8x128xi32>
    %c0_i32 = arith.constant 0 : i32
    %18 = arith.addi %c0_i32, %13 : i32
    %19 = vector.broadcast %18 : i32 to vector<1x8x128xi32>
    %20 = arith.addi %17, %19 : vector<1x8x128xi32>
    %c13_i32 = arith.constant 13 : i32
    %21 = arith.shli %18, %c13_i32 : i32
    %c19_i32 = arith.constant 19 : i32
    %22 = arith.shrsi %18, %c19_i32 : i32
    %c8191_i32 = arith.constant 8191 : i32
    %23 = arith.andi %22, %c8191_i32 : i32
    %24 = arith.ori %21, %23 : i32
    %25 = vector.broadcast %24 : i32 to vector<1x8x128xi32>
    %26 = arith.xori %25, %20 : vector<1x8x128xi32>
    %27 = arith.addi %20, %26 : vector<1x8x128xi32>
    %c15_i32 = arith.constant 15 : i32
    %28 = vector.broadcast %c15_i32 : i32 to vector<1x8x128xi32>
    %29 = arith.shli %26, %28 : vector<1x8x128xi32>
    %c17_i32 = arith.constant 17 : i32
    %30 = vector.broadcast %c17_i32 : i32 to vector<1x8x128xi32>
    %31 = arith.shrsi %26, %30 : vector<1x8x128xi32>
    %c32767_i32 = arith.constant 32767 : i32
    %32 = vector.broadcast %c32767_i32 : i32 to vector<1x8x128xi32>
    %33 = arith.andi %31, %32 : vector<1x8x128xi32>
    %34 = arith.ori %29, %33 : vector<1x8x128xi32>
    %35 = arith.xori %34, %27 : vector<1x8x128xi32>
    %36 = arith.addi %27, %35 : vector<1x8x128xi32>
    %c26_i32 = arith.constant 26 : i32
    %37 = vector.broadcast %c26_i32 : i32 to vector<1x8x128xi32>
    %38 = arith.shli %35, %37 : vector<1x8x128xi32>
    %c6_i32 = arith.constant 6 : i32
    %39 = vector.broadcast %c6_i32 : i32 to vector<1x8x128xi32>
    %40 = arith.shrsi %35, %39 : vector<1x8x128xi32>
    %c67108863_i32 = arith.constant 67108863 : i32
    %41 = vector.broadcast %c67108863_i32 : i32 to vector<1x8x128xi32>
    %42 = arith.andi %40, %41 : vector<1x8x128xi32>
    %43 = arith.ori %38, %42 : vector<1x8x128xi32>
    %44 = arith.xori %43, %36 : vector<1x8x128xi32>
    %45 = arith.addi %36, %44 : vector<1x8x128xi32>
    %c6_i32_0 = arith.constant 6 : i32
    %46 = vector.broadcast %c6_i32_0 : i32 to vector<1x8x128xi32>
    %47 = arith.shli %44, %46 : vector<1x8x128xi32>
    %c26_i32_1 = arith.constant 26 : i32
    %48 = vector.broadcast %c26_i32_1 : i32 to vector<1x8x128xi32>
    %49 = arith.shrsi %44, %48 : vector<1x8x128xi32>
    %c63_i32 = arith.constant 63 : i32
    %50 = vector.broadcast %c63_i32 : i32 to vector<1x8x128xi32>
    %51 = arith.andi %49, %50 : vector<1x8x128xi32>
    %52 = arith.ori %47, %51 : vector<1x8x128xi32>
    %53 = arith.xori %52, %45 : vector<1x8x128xi32>
    %54 = vector.broadcast %13 : i32 to vector<1x8x128xi32>
    %55 = arith.addi %45, %54 : vector<1x8x128xi32>
    %56 = vector.broadcast %15 : i32 to vector<1x8x128xi32>
    %57 = arith.addi %53, %56 : vector<1x8x128xi32>
    %c1_i32_2 = arith.constant 1 : i32
    %58 = vector.broadcast %c1_i32_2 : i32 to vector<1x8x128xi32>
    %59 = arith.addi %57, %58 : vector<1x8x128xi32>
    %60 = arith.addi %55, %59 : vector<1x8x128xi32>
    %c17_i32_3 = arith.constant 17 : i32
    %61 = vector.broadcast %c17_i32_3 : i32 to vector<1x8x128xi32>
    %62 = arith.shli %59, %61 : vector<1x8x128xi32>
    %c15_i32_4 = arith.constant 15 : i32
    %63 = vector.broadcast %c15_i32_4 : i32 to vector<1x8x128xi32>
    %64 = arith.shrsi %59, %63 : vector<1x8x128xi32>
    %c131071_i32 = arith.constant 131071 : i32
    %65 = vector.broadcast %c131071_i32 : i32 to vector<1x8x128xi32>
    %66 = arith.andi %64, %65 : vector<1x8x128xi32>
    %67 = arith.ori %62, %66 : vector<1x8x128xi32>
    %68 = arith.xori %67, %60 : vector<1x8x128xi32>
    %69 = arith.addi %60, %68 : vector<1x8x128xi32>
    %c29_i32 = arith.constant 29 : i32
    %70 = vector.broadcast %c29_i32 : i32 to vector<1x8x128xi32>
    %71 = arith.shli %68, %70 : vector<1x8x128xi32>
    %c3_i32 = arith.constant 3 : i32
    %72 = vector.broadcast %c3_i32 : i32 to vector<1x8x128xi32>
    %73 = arith.shrsi %68, %72 : vector<1x8x128xi32>
    %c536870911_i32 = arith.constant 536870911 : i32
    %74 = vector.broadcast %c536870911_i32 : i32 to vector<1x8x128xi32>
    %75 = arith.andi %73, %74 : vector<1x8x128xi32>
    %76 = arith.ori %71, %75 : vector<1x8x128xi32>
    %77 = arith.xori %76, %69 : vector<1x8x128xi32>
    %78 = arith.addi %69, %77 : vector<1x8x128xi32>
    %c16_i32 = arith.constant 16 : i32
    %79 = vector.broadcast %c16_i32 : i32 to vector<1x8x128xi32>
    %80 = arith.shli %77, %79 : vector<1x8x128xi32>
    %c16_i32_5 = arith.constant 16 : i32
    %81 = vector.broadcast %c16_i32_5 : i32 to vector<1x8x128xi32>
    %82 = arith.shrsi %77, %81 : vector<1x8x128xi32>
    %c65535_i32 = arith.constant 65535 : i32
    %83 = vector.broadcast %c65535_i32 : i32 to vector<1x8x128xi32>
    %84 = arith.andi %82, %83 : vector<1x8x128xi32>
    %85 = arith.ori %80, %84 : vector<1x8x128xi32>
    %86 = arith.xori %85, %78 : vector<1x8x128xi32>
    %87 = arith.addi %78, %86 : vector<1x8x128xi32>
    %c24_i32 = arith.constant 24 : i32
    %88 = vector.broadcast %c24_i32 : i32 to vector<1x8x128xi32>
    %89 = arith.shli %86, %88 : vector<1x8x128xi32>
    %c8_i32 = arith.constant 8 : i32
    %90 = vector.broadcast %c8_i32 : i32 to vector<1x8x128xi32>
    %91 = arith.shrsi %86, %90 : vector<1x8x128xi32>
    %c16777215_i32 = arith.constant 16777215 : i32
    %92 = vector.broadcast %c16777215_i32 : i32 to vector<1x8x128xi32>
    %93 = arith.andi %91, %92 : vector<1x8x128xi32>
    %94 = arith.ori %89, %93 : vector<1x8x128xi32>
    %95 = arith.xori %94, %87 : vector<1x8x128xi32>
    %96 = vector.broadcast %15 : i32 to vector<1x8x128xi32>
    %97 = arith.addi %87, %96 : vector<1x8x128xi32>
    %98 = vector.broadcast %12 : i32 to vector<1x8x128xi32>
    %99 = arith.addi %95, %98 : vector<1x8x128xi32>
    %c2_i32 = arith.constant 2 : i32
    %100 = vector.broadcast %c2_i32 : i32 to vector<1x8x128xi32>
    %101 = arith.addi %99, %100 : vector<1x8x128xi32>
    %102 = arith.addi %97, %101 : vector<1x8x128xi32>
    %c13_i32_6 = arith.constant 13 : i32
    %103 = vector.broadcast %c13_i32_6 : i32 to vector<1x8x128xi32>
    %104 = arith.shli %101, %103 : vector<1x8x128xi32>
    %c19_i32_7 = arith.constant 19 : i32
    %105 = vector.broadcast %c19_i32_7 : i32 to vector<1x8x128xi32>
    %106 = arith.shrsi %101, %105 : vector<1x8x128xi32>
    %c8191_i32_8 = arith.constant 8191 : i32
    %107 = vector.broadcast %c8191_i32_8 : i32 to vector<1x8x128xi32>
    %108 = arith.andi %106, %107 : vector<1x8x128xi32>
    %109 = arith.ori %104, %108 : vector<1x8x128xi32>
    %110 = arith.xori %109, %102 : vector<1x8x128xi32>
    %111 = arith.addi %102, %110 : vector<1x8x128xi32>
    %c15_i32_9 = arith.constant 15 : i32
    %112 = vector.broadcast %c15_i32_9 : i32 to vector<1x8x128xi32>
    %113 = arith.shli %110, %112 : vector<1x8x128xi32>
    %c17_i32_10 = arith.constant 17 : i32
    %114 = vector.broadcast %c17_i32_10 : i32 to vector<1x8x128xi32>
    %115 = arith.shrsi %110, %114 : vector<1x8x128xi32>
    %c32767_i32_11 = arith.constant 32767 : i32
    %116 = vector.broadcast %c32767_i32_11 : i32 to vector<1x8x128xi32>
    %117 = arith.andi %115, %116 : vector<1x8x128xi32>
    %118 = arith.ori %113, %117 : vector<1x8x128xi32>
    %119 = arith.xori %118, %111 : vector<1x8x128xi32>
    %120 = arith.addi %111, %119 : vector<1x8x128xi32>
    %c26_i32_12 = arith.constant 26 : i32
    %121 = vector.broadcast %c26_i32_12 : i32 to vector<1x8x128xi32>
    %122 = arith.shli %119, %121 : vector<1x8x128xi32>
    %c6_i32_13 = arith.constant 6 : i32
    %123 = vector.broadcast %c6_i32_13 : i32 to vector<1x8x128xi32>
    %124 = arith.shrsi %119, %123 : vector<1x8x128xi32>
    %c67108863_i32_14 = arith.constant 67108863 : i32
    %125 = vector.broadcast %c67108863_i32_14 : i32 to vector<1x8x128xi32>
    %126 = arith.andi %124, %125 : vector<1x8x128xi32>
    %127 = arith.ori %122, %126 : vector<1x8x128xi32>
    %128 = arith.xori %127, %120 : vector<1x8x128xi32>
    %129 = arith.addi %120, %128 : vector<1x8x128xi32>
    %c6_i32_15 = arith.constant 6 : i32
    %130 = vector.broadcast %c6_i32_15 : i32 to vector<1x8x128xi32>
    %131 = arith.shli %128, %130 : vector<1x8x128xi32>
    %c26_i32_16 = arith.constant 26 : i32
    %132 = vector.broadcast %c26_i32_16 : i32 to vector<1x8x128xi32>
    %133 = arith.shrsi %128, %132 : vector<1x8x128xi32>
    %c63_i32_17 = arith.constant 63 : i32
    %134 = vector.broadcast %c63_i32_17 : i32 to vector<1x8x128xi32>
    %135 = arith.andi %133, %134 : vector<1x8x128xi32>
    %136 = arith.ori %131, %135 : vector<1x8x128xi32>
    %137 = arith.xori %136, %129 : vector<1x8x128xi32>
    %138 = vector.broadcast %12 : i32 to vector<1x8x128xi32>
    %139 = arith.addi %129, %138 : vector<1x8x128xi32>
    %140 = vector.broadcast %13 : i32 to vector<1x8x128xi32>
    %141 = arith.addi %137, %140 : vector<1x8x128xi32>
    %c3_i32_18 = arith.constant 3 : i32
    %142 = vector.broadcast %c3_i32_18 : i32 to vector<1x8x128xi32>
    %143 = arith.addi %141, %142 : vector<1x8x128xi32>
    %144 = arith.addi %139, %143 : vector<1x8x128xi32>
    %c17_i32_19 = arith.constant 17 : i32
    %145 = vector.broadcast %c17_i32_19 : i32 to vector<1x8x128xi32>
    %146 = arith.shli %143, %145 : vector<1x8x128xi32>
    %c15_i32_20 = arith.constant 15 : i32
    %147 = vector.broadcast %c15_i32_20 : i32 to vector<1x8x128xi32>
    %148 = arith.shrsi %143, %147 : vector<1x8x128xi32>
    %c131071_i32_21 = arith.constant 131071 : i32
    %149 = vector.broadcast %c131071_i32_21 : i32 to vector<1x8x128xi32>
    %150 = arith.andi %148, %149 : vector<1x8x128xi32>
    %151 = arith.ori %146, %150 : vector<1x8x128xi32>
    %152 = arith.xori %151, %144 : vector<1x8x128xi32>
    %153 = arith.addi %144, %152 : vector<1x8x128xi32>
    %c29_i32_22 = arith.constant 29 : i32
    %154 = vector.broadcast %c29_i32_22 : i32 to vector<1x8x128xi32>
    %155 = arith.shli %152, %154 : vector<1x8x128xi32>
    %c3_i32_23 = arith.constant 3 : i32
    %156 = vector.broadcast %c3_i32_23 : i32 to vector<1x8x128xi32>
    %157 = arith.shrsi %152, %156 : vector<1x8x128xi32>
    %c536870911_i32_24 = arith.constant 536870911 : i32
    %158 = vector.broadcast %c536870911_i32_24 : i32 to vector<1x8x128xi32>
    %159 = arith.andi %157, %158 : vector<1x8x128xi32>
    %160 = arith.ori %155, %159 : vector<1x8x128xi32>
    %161 = arith.xori %160, %153 : vector<1x8x128xi32>
    %162 = arith.addi %153, %161 : vector<1x8x128xi32>
    %c16_i32_25 = arith.constant 16 : i32
    %163 = vector.broadcast %c16_i32_25 : i32 to vector<1x8x128xi32>
    %164 = arith.shli %161, %163 : vector<1x8x128xi32>
    %c16_i32_26 = arith.constant 16 : i32
    %165 = vector.broadcast %c16_i32_26 : i32 to vector<1x8x128xi32>
    %166 = arith.shrsi %161, %165 : vector<1x8x128xi32>
    %c65535_i32_27 = arith.constant 65535 : i32
    %167 = vector.broadcast %c65535_i32_27 : i32 to vector<1x8x128xi32>
    %168 = arith.andi %166, %167 : vector<1x8x128xi32>
    %169 = arith.ori %164, %168 : vector<1x8x128xi32>
    %170 = arith.xori %169, %162 : vector<1x8x128xi32>
    %171 = arith.addi %162, %170 : vector<1x8x128xi32>
    %c24_i32_28 = arith.constant 24 : i32
    %172 = vector.broadcast %c24_i32_28 : i32 to vector<1x8x128xi32>
    %173 = arith.shli %170, %172 : vector<1x8x128xi32>
    %c8_i32_29 = arith.constant 8 : i32
    %174 = vector.broadcast %c8_i32_29 : i32 to vector<1x8x128xi32>
    %175 = arith.shrsi %170, %174 : vector<1x8x128xi32>
    %c16777215_i32_30 = arith.constant 16777215 : i32
    %176 = vector.broadcast %c16777215_i32_30 : i32 to vector<1x8x128xi32>
    %177 = arith.andi %175, %176 : vector<1x8x128xi32>
    %178 = arith.ori %173, %177 : vector<1x8x128xi32>
    %179 = arith.xori %178, %171 : vector<1x8x128xi32>
    %180 = vector.broadcast %13 : i32 to vector<1x8x128xi32>
    %181 = arith.addi %171, %180 : vector<1x8x128xi32>
    %182 = vector.broadcast %15 : i32 to vector<1x8x128xi32>
    %183 = arith.addi %179, %182 : vector<1x8x128xi32>
    %c4_i32 = arith.constant 4 : i32
    %184 = vector.broadcast %c4_i32 : i32 to vector<1x8x128xi32>
    %185 = arith.addi %183, %184 : vector<1x8x128xi32>
    %186 = arith.addi %181, %185 : vector<1x8x128xi32>
    %c13_i32_31 = arith.constant 13 : i32
    %187 = vector.broadcast %c13_i32_31 : i32 to vector<1x8x128xi32>
    %188 = arith.shli %185, %187 : vector<1x8x128xi32>
    %c19_i32_32 = arith.constant 19 : i32
    %189 = vector.broadcast %c19_i32_32 : i32 to vector<1x8x128xi32>
    %190 = arith.shrsi %185, %189 : vector<1x8x128xi32>
    %c8191_i32_33 = arith.constant 8191 : i32
    %191 = vector.broadcast %c8191_i32_33 : i32 to vector<1x8x128xi32>
    %192 = arith.andi %190, %191 : vector<1x8x128xi32>
    %193 = arith.ori %188, %192 : vector<1x8x128xi32>
    %194 = arith.xori %193, %186 : vector<1x8x128xi32>
    %195 = arith.addi %186, %194 : vector<1x8x128xi32>
    %c15_i32_34 = arith.constant 15 : i32
    %196 = vector.broadcast %c15_i32_34 : i32 to vector<1x8x128xi32>
    %197 = arith.shli %194, %196 : vector<1x8x128xi32>
    %c17_i32_35 = arith.constant 17 : i32
    %198 = vector.broadcast %c17_i32_35 : i32 to vector<1x8x128xi32>
    %199 = arith.shrsi %194, %198 : vector<1x8x128xi32>
    %c32767_i32_36 = arith.constant 32767 : i32
    %200 = vector.broadcast %c32767_i32_36 : i32 to vector<1x8x128xi32>
    %201 = arith.andi %199, %200 : vector<1x8x128xi32>
    %202 = arith.ori %197, %201 : vector<1x8x128xi32>
    %203 = arith.xori %202, %195 : vector<1x8x128xi32>
    %204 = arith.addi %195, %203 : vector<1x8x128xi32>
    %c26_i32_37 = arith.constant 26 : i32
    %205 = vector.broadcast %c26_i32_37 : i32 to vector<1x8x128xi32>
    %206 = arith.shli %203, %205 : vector<1x8x128xi32>
    %c6_i32_38 = arith.constant 6 : i32
    %207 = vector.broadcast %c6_i32_38 : i32 to vector<1x8x128xi32>
    %208 = arith.shrsi %203, %207 : vector<1x8x128xi32>
    %c67108863_i32_39 = arith.constant 67108863 : i32
    %209 = vector.broadcast %c67108863_i32_39 : i32 to vector<1x8x128xi32>
    %210 = arith.andi %208, %209 : vector<1x8x128xi32>
    %211 = arith.ori %206, %210 : vector<1x8x128xi32>
    %212 = arith.xori %211, %204 : vector<1x8x128xi32>
    %213 = arith.addi %204, %212 : vector<1x8x128xi32>
    %c6_i32_40 = arith.constant 6 : i32
    %214 = vector.broadcast %c6_i32_40 : i32 to vector<1x8x128xi32>
    %215 = arith.shli %212, %214 : vector<1x8x128xi32>
    %c26_i32_41 = arith.constant 26 : i32
    %216 = vector.broadcast %c26_i32_41 : i32 to vector<1x8x128xi32>
    %217 = arith.shrsi %212, %216 : vector<1x8x128xi32>
    %c63_i32_42 = arith.constant 63 : i32
    %218 = vector.broadcast %c63_i32_42 : i32 to vector<1x8x128xi32>
    %219 = arith.andi %217, %218 : vector<1x8x128xi32>
    %220 = arith.ori %215, %219 : vector<1x8x128xi32>
    %221 = arith.xori %220, %213 : vector<1x8x128xi32>
    %222 = vector.broadcast %15 : i32 to vector<1x8x128xi32>
    %223 = arith.addi %213, %222 : vector<1x8x128xi32>
    %224 = vector.broadcast %12 : i32 to vector<1x8x128xi32>
    %225 = arith.addi %221, %224 : vector<1x8x128xi32>
    %c5_i32 = arith.constant 5 : i32
    %226 = vector.broadcast %c5_i32 : i32 to vector<1x8x128xi32>
    %227 = arith.addi %225, %226 : vector<1x8x128xi32>
    %c8_i32_43 = arith.constant 8 : i32
    %228 = vector.broadcast %c8_i32_43 : i32 to vector<1x8x128xi32>
    %229 = arith.shrsi %223, %228 : vector<1x8x128xi32>
    %c16777215_i32_44 = arith.constant 16777215 : i32
    %230 = vector.broadcast %c16777215_i32_44 : i32 to vector<1x8x128xi32>
    %231 = arith.andi %229, %230 : vector<1x8x128xi32>
    %232 = arith.sitofp %231 : vector<1x8x128xi32> to vector<1x8x128xf32>
    %cst = arith.constant 5.000000e-01 : f32
    %233 = vector.broadcast %cst : f32 to vector<1x8x128xf32>
    %234 = arith.addf %232, %233 : vector<1x8x128xf32>
    %cst_45 = arith.constant 5.96046448E-8 : f32
    %235 = vector.broadcast %cst_45 : f32 to vector<1x8x128xf32>
    %236 = arith.mulf %234, %235 : vector<1x8x128xf32>
    %c8_i32_46 = arith.constant 8 : i32
    %237 = vector.broadcast %c8_i32_46 : i32 to vector<1x8x128xi32>
    %238 = arith.shrsi %227, %237 : vector<1x8x128xi32>
    %c16777215_i32_47 = arith.constant 16777215 : i32
    %239 = vector.broadcast %c16777215_i32_47 : i32 to vector<1x8x128xi32>
    %240 = arith.andi %238, %239 : vector<1x8x128xi32>
    %241 = arith.sitofp %240 : vector<1x8x128xi32> to vector<1x8x128xf32>
    %cst_48 = arith.constant 5.000000e-01 : f32
    %242 = vector.broadcast %cst_48 : f32 to vector<1x8x128xf32>
    %243 = arith.addf %241, %242 : vector<1x8x128xf32>
    %cst_49 = arith.constant 5.96046448E-8 : f32
    %244 = vector.broadcast %cst_49 : f32 to vector<1x8x128xf32>
    %245 = arith.mulf %243, %244 : vector<1x8x128xf32>
    %cst_50 = arith.constant 1.57079637 : f32
    %246 = vector.broadcast %cst_50 : f32 to vector<1x8x128xf32>
    %247 = arith.mulf %246, %245 : vector<1x8x128xf32>
    %248 = arith.mulf %247, %247 : vector<1x8x128xf32>
    %cst_51 = arith.constant -2.50521079E-8 : f32
    %249 = vector.broadcast %cst_51 : f32 to vector<1x8x128xf32>
    %250 = arith.mulf %249, %248 : vector<1x8x128xf32>
    %cst_52 = arith.constant 2.75573188E-6 : f32
    %251 = vector.broadcast %cst_52 : f32 to vector<1x8x128xf32>
    %252 = arith.addf %250, %251 : vector<1x8x128xf32>
    %253 = arith.mulf %252, %248 : vector<1x8x128xf32>
    %cst_53 = arith.constant -1.98412701E-4 : f32
    %254 = vector.broadcast %cst_53 : f32 to vector<1x8x128xf32>
    %255 = arith.addf %253, %254 : vector<1x8x128xf32>
    %256 = arith.mulf %255, %248 : vector<1x8x128xf32>
    %cst_54 = arith.constant 0.00833333377 : f32
    %257 = vector.broadcast %cst_54 : f32 to vector<1x8x128xf32>
    %258 = arith.addf %256, %257 : vector<1x8x128xf32>
    %259 = arith.mulf %258, %248 : vector<1x8x128xf32>
    %cst_55 = arith.constant -0.166666672 : f32
    %260 = vector.broadcast %cst_55 : f32 to vector<1x8x128xf32>
    %261 = arith.addf %259, %260 : vector<1x8x128xf32>
    %262 = arith.mulf %261, %248 : vector<1x8x128xf32>
    %cst_56 = arith.constant 1.000000e+00 : f32
    %263 = vector.broadcast %cst_56 : f32 to vector<1x8x128xf32>
    %264 = arith.addf %262, %263 : vector<1x8x128xf32>
    %265 = arith.mulf %247, %264 : vector<1x8x128xf32>
    %266 = math.log %236 : vector<1x8x128xf32>
    %cst_57 = arith.constant -2.000000e+00 : f32
    %267 = vector.broadcast %cst_57 : f32 to vector<1x8x128xf32>
    %268 = arith.mulf %267, %266 : vector<1x8x128xf32>
    %269 = arith.mulf %265, %265 : vector<1x8x128xf32>
    %270 = arith.mulf %268, %269 : vector<1x8x128xf32>
    %c0_i32_58 = arith.constant 0 : i32
    %271 = arith.subi %1, %c0_i32_58 : i32
    %272 = arith.addi %c0_i32_58, %271 : i32
    %c1_i32_59 = arith.constant 1 : i32
    %273 = scf.for %arg7 = %c0_i32_58 to %272 step %c1_i32_59 iter_args(%arg8 = %270) -> (vector<1x8x128xf32>)  : i32 {
      %c1_i32_69 = arith.constant 1 : i32
      %281 = arith.addi %arg7, %c1_i32_69 : i32
      %282 = arith.xori %12, %13 : i32
      %c466688986_i32_70 = arith.constant 466688986 : i32
      %283 = arith.xori %282, %c466688986_i32_70 : i32
      %284 = vector.broadcast %12 : i32 to vector<1x8x128xi32>
      %285 = arith.addi %11, %284 : vector<1x8x128xi32>
      %286 = arith.addi %281, %13 : i32
      %287 = vector.broadcast %286 : i32 to vector<1x8x128xi32>
      %288 = arith.addi %285, %287 : vector<1x8x128xi32>
      %c13_i32_71 = arith.constant 13 : i32
      %289 = arith.shli %286, %c13_i32_71 : i32
      %c19_i32_72 = arith.constant 19 : i32
      %290 = arith.shrsi %286, %c19_i32_72 : i32
      %c8191_i32_73 = arith.constant 8191 : i32
      %291 = arith.andi %290, %c8191_i32_73 : i32
      %292 = arith.ori %289, %291 : i32
      %293 = vector.broadcast %292 : i32 to vector<1x8x128xi32>
      %294 = arith.xori %293, %288 : vector<1x8x128xi32>
      %295 = arith.addi %288, %294 : vector<1x8x128xi32>
      %c15_i32_74 = arith.constant 15 : i32
      %296 = vector.broadcast %c15_i32_74 : i32 to vector<1x8x128xi32>
      %297 = arith.shli %294, %296 : vector<1x8x128xi32>
      %c17_i32_75 = arith.constant 17 : i32
      %298 = vector.broadcast %c17_i32_75 : i32 to vector<1x8x128xi32>
      %299 = arith.shrsi %294, %298 : vector<1x8x128xi32>
      %c32767_i32_76 = arith.constant 32767 : i32
      %300 = vector.broadcast %c32767_i32_76 : i32 to vector<1x8x128xi32>
      %301 = arith.andi %299, %300 : vector<1x8x128xi32>
      %302 = arith.ori %297, %301 : vector<1x8x128xi32>
      %303 = arith.xori %302, %295 : vector<1x8x128xi32>
      %304 = arith.addi %295, %303 : vector<1x8x128xi32>
      %c26_i32_77 = arith.constant 26 : i32
      %305 = vector.broadcast %c26_i32_77 : i32 to vector<1x8x128xi32>
      %306 = arith.shli %303, %305 : vector<1x8x128xi32>
      %c6_i32_78 = arith.constant 6 : i32
      %307 = vector.broadcast %c6_i32_78 : i32 to vector<1x8x128xi32>
      %308 = arith.shrsi %303, %307 : vector<1x8x128xi32>
      %c67108863_i32_79 = arith.constant 67108863 : i32
      %309 = vector.broadcast %c67108863_i32_79 : i32 to vector<1x8x128xi32>
      %310 = arith.andi %308, %309 : vector<1x8x128xi32>
      %311 = arith.ori %306, %310 : vector<1x8x128xi32>
      %312 = arith.xori %311, %304 : vector<1x8x128xi32>
      %313 = arith.addi %304, %312 : vector<1x8x128xi32>
      %c6_i32_80 = arith.constant 6 : i32
      %314 = vector.broadcast %c6_i32_80 : i32 to vector<1x8x128xi32>
      %315 = arith.shli %312, %314 : vector<1x8x128xi32>
      %c26_i32_81 = arith.constant 26 : i32
      %316 = vector.broadcast %c26_i32_81 : i32 to vector<1x8x128xi32>
      %317 = arith.shrsi %312, %316 : vector<1x8x128xi32>
      %c63_i32_82 = arith.constant 63 : i32
      %318 = vector.broadcast %c63_i32_82 : i32 to vector<1x8x128xi32>
      %319 = arith.andi %317, %318 : vector<1x8x128xi32>
      %320 = arith.ori %315, %319 : vector<1x8x128xi32>
      %321 = arith.xori %320, %313 : vector<1x8x128xi32>
      %322 = vector.broadcast %13 : i32 to vector<1x8x128xi32>
      %323 = arith.addi %313, %322 : vector<1x8x128xi32>
      %324 = vector.broadcast %283 : i32 to vector<1x8x128xi32>
      %325 = arith.addi %321, %324 : vector<1x8x128xi32>
      %c1_i32_83 = arith.constant 1 : i32
      %326 = vector.broadcast %c1_i32_83 : i32 to vector<1x8x128xi32>
      %327 = arith.addi %325, %326 : vector<1x8x128xi32>
      %328 = arith.addi %323, %327 : vector<1x8x128xi32>
      %c17_i32_84 = arith.constant 17 : i32
      %329 = vector.broadcast %c17_i32_84 : i32 to vector<1x8x128xi32>
      %330 = arith.shli %327, %329 : vector<1x8x128xi32>
      %c15_i32_85 = arith.constant 15 : i32
      %331 = vector.broadcast %c15_i32_85 : i32 to vector<1x8x128xi32>
      %332 = arith.shrsi %327, %331 : vector<1x8x128xi32>
      %c131071_i32_86 = arith.constant 131071 : i32
      %333 = vector.broadcast %c131071_i32_86 : i32 to vector<1x8x128xi32>
      %334 = arith.andi %332, %333 : vector<1x8x128xi32>
      %335 = arith.ori %330, %334 : vector<1x8x128xi32>
      %336 = arith.xori %335, %328 : vector<1x8x128xi32>
      %337 = arith.addi %328, %336 : vector<1x8x128xi32>
      %c29_i32_87 = arith.constant 29 : i32
      %338 = vector.broadcast %c29_i32_87 : i32 to vector<1x8x128xi32>
      %339 = arith.shli %336, %338 : vector<1x8x128xi32>
      %c3_i32_88 = arith.constant 3 : i32
      %340 = vector.broadcast %c3_i32_88 : i32 to vector<1x8x128xi32>
      %341 = arith.shrsi %336, %340 : vector<1x8x128xi32>
      %c536870911_i32_89 = arith.constant 536870911 : i32
      %342 = vector.broadcast %c536870911_i32_89 : i32 to vector<1x8x128xi32>
      %343 = arith.andi %341, %342 : vector<1x8x128xi32>
      %344 = arith.ori %339, %343 : vector<1x8x128xi32>
      %345 = arith.xori %344, %337 : vector<1x8x128xi32>
      %346 = arith.addi %337, %345 : vector<1x8x128xi32>
      %c16_i32_90 = arith.constant 16 : i32
      %347 = vector.broadcast %c16_i32_90 : i32 to vector<1x8x128xi32>
      %348 = arith.shli %345, %347 : vector<1x8x128xi32>
      %c16_i32_91 = arith.constant 16 : i32
      %349 = vector.broadcast %c16_i32_91 : i32 to vector<1x8x128xi32>
      %350 = arith.shrsi %345, %349 : vector<1x8x128xi32>
      %c65535_i32_92 = arith.constant 65535 : i32
      %351 = vector.broadcast %c65535_i32_92 : i32 to vector<1x8x128xi32>
      %352 = arith.andi %350, %351 : vector<1x8x128xi32>
      %353 = arith.ori %348, %352 : vector<1x8x128xi32>
      %354 = arith.xori %353, %346 : vector<1x8x128xi32>
      %355 = arith.addi %346, %354 : vector<1x8x128xi32>
      %c24_i32_93 = arith.constant 24 : i32
      %356 = vector.broadcast %c24_i32_93 : i32 to vector<1x8x128xi32>
      %357 = arith.shli %354, %356 : vector<1x8x128xi32>
      %c8_i32_94 = arith.constant 8 : i32
      %358 = vector.broadcast %c8_i32_94 : i32 to vector<1x8x128xi32>
      %359 = arith.shrsi %354, %358 : vector<1x8x128xi32>
      %c16777215_i32_95 = arith.constant 16777215 : i32
      %360 = vector.broadcast %c16777215_i32_95 : i32 to vector<1x8x128xi32>
      %361 = arith.andi %359, %360 : vector<1x8x128xi32>
      %362 = arith.ori %357, %361 : vector<1x8x128xi32>
      %363 = arith.xori %362, %355 : vector<1x8x128xi32>
      %364 = vector.broadcast %283 : i32 to vector<1x8x128xi32>
      %365 = arith.addi %355, %364 : vector<1x8x128xi32>
      %366 = vector.broadcast %12 : i32 to vector<1x8x128xi32>
      %367 = arith.addi %363, %366 : vector<1x8x128xi32>
      %c2_i32_96 = arith.constant 2 : i32
      %368 = vector.broadcast %c2_i32_96 : i32 to vector<1x8x128xi32>
      %369 = arith.addi %367, %368 : vector<1x8x128xi32>
      %370 = arith.addi %365, %369 : vector<1x8x128xi32>
      %c13_i32_97 = arith.constant 13 : i32
      %371 = vector.broadcast %c13_i32_97 : i32 to vector<1x8x128xi32>
      %372 = arith.shli %369, %371 : vector<1x8x128xi32>
      %c19_i32_98 = arith.constant 19 : i32
      %373 = vector.broadcast %c19_i32_98 : i32 to vector<1x8x128xi32>
      %374 = arith.shrsi %369, %373 : vector<1x8x128xi32>
      %c8191_i32_99 = arith.constant 8191 : i32
      %375 = vector.broadcast %c8191_i32_99 : i32 to vector<1x8x128xi32>
      %376 = arith.andi %374, %375 : vector<1x8x128xi32>
      %377 = arith.ori %372, %376 : vector<1x8x128xi32>
      %378 = arith.xori %377, %370 : vector<1x8x128xi32>
      %379 = arith.addi %370, %378 : vector<1x8x128xi32>
      %c15_i32_100 = arith.constant 15 : i32
      %380 = vector.broadcast %c15_i32_100 : i32 to vector<1x8x128xi32>
      %381 = arith.shli %378, %380 : vector<1x8x128xi32>
      %c17_i32_101 = arith.constant 17 : i32
      %382 = vector.broadcast %c17_i32_101 : i32 to vector<1x8x128xi32>
      %383 = arith.shrsi %378, %382 : vector<1x8x128xi32>
      %c32767_i32_102 = arith.constant 32767 : i32
      %384 = vector.broadcast %c32767_i32_102 : i32 to vector<1x8x128xi32>
      %385 = arith.andi %383, %384 : vector<1x8x128xi32>
      %386 = arith.ori %381, %385 : vector<1x8x128xi32>
      %387 = arith.xori %386, %379 : vector<1x8x128xi32>
      %388 = arith.addi %379, %387 : vector<1x8x128xi32>
      %c26_i32_103 = arith.constant 26 : i32
      %389 = vector.broadcast %c26_i32_103 : i32 to vector<1x8x128xi32>
      %390 = arith.shli %387, %389 : vector<1x8x128xi32>
      %c6_i32_104 = arith.constant 6 : i32
      %391 = vector.broadcast %c6_i32_104 : i32 to vector<1x8x128xi32>
      %392 = arith.shrsi %387, %391 : vector<1x8x128xi32>
      %c67108863_i32_105 = arith.constant 67108863 : i32
      %393 = vector.broadcast %c67108863_i32_105 : i32 to vector<1x8x128xi32>
      %394 = arith.andi %392, %393 : vector<1x8x128xi32>
      %395 = arith.ori %390, %394 : vector<1x8x128xi32>
      %396 = arith.xori %395, %388 : vector<1x8x128xi32>
      %397 = arith.addi %388, %396 : vector<1x8x128xi32>
      %c6_i32_106 = arith.constant 6 : i32
      %398 = vector.broadcast %c6_i32_106 : i32 to vector<1x8x128xi32>
      %399 = arith.shli %396, %398 : vector<1x8x128xi32>
      %c26_i32_107 = arith.constant 26 : i32
      %400 = vector.broadcast %c26_i32_107 : i32 to vector<1x8x128xi32>
      %401 = arith.shrsi %396, %400 : vector<1x8x128xi32>
      %c63_i32_108 = arith.constant 63 : i32
      %402 = vector.broadcast %c63_i32_108 : i32 to vector<1x8x128xi32>
      %403 = arith.andi %401, %402 : vector<1x8x128xi32>
      %404 = arith.ori %399, %403 : vector<1x8x128xi32>
      %405 = arith.xori %404, %397 : vector<1x8x128xi32>
      %406 = vector.broadcast %12 : i32 to vector<1x8x128xi32>
      %407 = arith.addi %397, %406 : vector<1x8x128xi32>
      %408 = vector.broadcast %13 : i32 to vector<1x8x128xi32>
      %409 = arith.addi %405, %408 : vector<1x8x128xi32>
      %c3_i32_109 = arith.constant 3 : i32
      %410 = vector.broadcast %c3_i32_109 : i32 to vector<1x8x128xi32>
      %411 = arith.addi %409, %410 : vector<1x8x128xi32>
      %412 = arith.addi %407, %411 : vector<1x8x128xi32>
      %c17_i32_110 = arith.constant 17 : i32
      %413 = vector.broadcast %c17_i32_110 : i32 to vector<1x8x128xi32>
      %414 = arith.shli %411, %413 : vector<1x8x128xi32>
      %c15_i32_111 = arith.constant 15 : i32
      %415 = vector.broadcast %c15_i32_111 : i32 to vector<1x8x128xi32>
      %416 = arith.shrsi %411, %415 : vector<1x8x128xi32>
      %c131071_i32_112 = arith.constant 131071 : i32
      %417 = vector.broadcast %c131071_i32_112 : i32 to vector<1x8x128xi32>
      %418 = arith.andi %416, %417 : vector<1x8x128xi32>
      %419 = arith.ori %414, %418 : vector<1x8x128xi32>
      %420 = arith.xori %419, %412 : vector<1x8x128xi32>
      %421 = arith.addi %412, %420 : vector<1x8x128xi32>
      %c29_i32_113 = arith.constant 29 : i32
      %422 = vector.broadcast %c29_i32_113 : i32 to vector<1x8x128xi32>
      %423 = arith.shli %420, %422 : vector<1x8x128xi32>
      %c3_i32_114 = arith.constant 3 : i32
      %424 = vector.broadcast %c3_i32_114 : i32 to vector<1x8x128xi32>
      %425 = arith.shrsi %420, %424 : vector<1x8x128xi32>
      %c536870911_i32_115 = arith.constant 536870911 : i32
      %426 = vector.broadcast %c536870911_i32_115 : i32 to vector<1x8x128xi32>
      %427 = arith.andi %425, %426 : vector<1x8x128xi32>
      %428 = arith.ori %423, %427 : vector<1x8x128xi32>
      %429 = arith.xori %428, %421 : vector<1x8x128xi32>
      %430 = arith.addi %421, %429 : vector<1x8x128xi32>
      %c16_i32_116 = arith.constant 16 : i32
      %431 = vector.broadcast %c16_i32_116 : i32 to vector<1x8x128xi32>
      %432 = arith.shli %429, %431 : vector<1x8x128xi32>
      %c16_i32_117 = arith.constant 16 : i32
      %433 = vector.broadcast %c16_i32_117 : i32 to vector<1x8x128xi32>
      %434 = arith.shrsi %429, %433 : vector<1x8x128xi32>
      %c65535_i32_118 = arith.constant 65535 : i32
      %435 = vector.broadcast %c65535_i32_118 : i32 to vector<1x8x128xi32>
      %436 = arith.andi %434, %435 : vector<1x8x128xi32>
      %437 = arith.ori %432, %436 : vector<1x8x128xi32>
      %438 = arith.xori %437, %430 : vector<1x8x128xi32>
      %439 = arith.addi %430, %438 : vector<1x8x128xi32>
      %c24_i32_119 = arith.constant 24 : i32
      %440 = vector.broadcast %c24_i32_119 : i32 to vector<1x8x128xi32>
      %441 = arith.shli %438, %440 : vector<1x8x128xi32>
      %c8_i32_120 = arith.constant 8 : i32
      %442 = vector.broadcast %c8_i32_120 : i32 to vector<1x8x128xi32>
      %443 = arith.shrsi %438, %442 : vector<1x8x128xi32>
      %c16777215_i32_121 = arith.constant 16777215 : i32
      %444 = vector.broadcast %c16777215_i32_121 : i32 to vector<1x8x128xi32>
      %445 = arith.andi %443, %444 : vector<1x8x128xi32>
      %446 = arith.ori %441, %445 : vector<1x8x128xi32>
      %447 = arith.xori %446, %439 : vector<1x8x128xi32>
      %448 = vector.broadcast %13 : i32 to vector<1x8x128xi32>
      %449 = arith.addi %439, %448 : vector<1x8x128xi32>
      %450 = vector.broadcast %283 : i32 to vector<1x8x128xi32>
      %451 = arith.addi %447, %450 : vector<1x8x128xi32>
      %c4_i32_122 = arith.constant 4 : i32
      %452 = vector.broadcast %c4_i32_122 : i32 to vector<1x8x128xi32>
      %453 = arith.addi %451, %452 : vector<1x8x128xi32>
      %454 = arith.addi %449, %453 : vector<1x8x128xi32>
      %c13_i32_123 = arith.constant 13 : i32
      %455 = vector.broadcast %c13_i32_123 : i32 to vector<1x8x128xi32>
      %456 = arith.shli %453, %455 : vector<1x8x128xi32>
      %c19_i32_124 = arith.constant 19 : i32
      %457 = vector.broadcast %c19_i32_124 : i32 to vector<1x8x128xi32>
      %458 = arith.shrsi %453, %457 : vector<1x8x128xi32>
      %c8191_i32_125 = arith.constant 8191 : i32
      %459 = vector.broadcast %c8191_i32_125 : i32 to vector<1x8x128xi32>
      %460 = arith.andi %458, %459 : vector<1x8x128xi32>
      %461 = arith.ori %456, %460 : vector<1x8x128xi32>
      %462 = arith.xori %461, %454 : vector<1x8x128xi32>
      %463 = arith.addi %454, %462 : vector<1x8x128xi32>
      %c15_i32_126 = arith.constant 15 : i32
      %464 = vector.broadcast %c15_i32_126 : i32 to vector<1x8x128xi32>
      %465 = arith.shli %462, %464 : vector<1x8x128xi32>
      %c17_i32_127 = arith.constant 17 : i32
      %466 = vector.broadcast %c17_i32_127 : i32 to vector<1x8x128xi32>
      %467 = arith.shrsi %462, %466 : vector<1x8x128xi32>
      %c32767_i32_128 = arith.constant 32767 : i32
      %468 = vector.broadcast %c32767_i32_128 : i32 to vector<1x8x128xi32>
      %469 = arith.andi %467, %468 : vector<1x8x128xi32>
      %470 = arith.ori %465, %469 : vector<1x8x128xi32>
      %471 = arith.xori %470, %463 : vector<1x8x128xi32>
      %472 = arith.addi %463, %471 : vector<1x8x128xi32>
      %c26_i32_129 = arith.constant 26 : i32
      %473 = vector.broadcast %c26_i32_129 : i32 to vector<1x8x128xi32>
      %474 = arith.shli %471, %473 : vector<1x8x128xi32>
      %c6_i32_130 = arith.constant 6 : i32
      %475 = vector.broadcast %c6_i32_130 : i32 to vector<1x8x128xi32>
      %476 = arith.shrsi %471, %475 : vector<1x8x128xi32>
      %c67108863_i32_131 = arith.constant 67108863 : i32
      %477 = vector.broadcast %c67108863_i32_131 : i32 to vector<1x8x128xi32>
      %478 = arith.andi %476, %477 : vector<1x8x128xi32>
      %479 = arith.ori %474, %478 : vector<1x8x128xi32>
      %480 = arith.xori %479, %472 : vector<1x8x128xi32>
      %481 = arith.addi %472, %480 : vector<1x8x128xi32>
      %c6_i32_132 = arith.constant 6 : i32
      %482 = vector.broadcast %c6_i32_132 : i32 to vector<1x8x128xi32>
      %483 = arith.shli %480, %482 : vector<1x8x128xi32>
      %c26_i32_133 = arith.constant 26 : i32
      %484 = vector.broadcast %c26_i32_133 : i32 to vector<1x8x128xi32>
      %485 = arith.shrsi %480, %484 : vector<1x8x128xi32>
      %c63_i32_134 = arith.constant 63 : i32
      %486 = vector.broadcast %c63_i32_134 : i32 to vector<1x8x128xi32>
      %487 = arith.andi %485, %486 : vector<1x8x128xi32>
      %488 = arith.ori %483, %487 : vector<1x8x128xi32>
      %489 = arith.xori %488, %481 : vector<1x8x128xi32>
      %490 = vector.broadcast %283 : i32 to vector<1x8x128xi32>
      %491 = arith.addi %481, %490 : vector<1x8x128xi32>
      %492 = vector.broadcast %12 : i32 to vector<1x8x128xi32>
      %493 = arith.addi %489, %492 : vector<1x8x128xi32>
      %c5_i32_135 = arith.constant 5 : i32
      %494 = vector.broadcast %c5_i32_135 : i32 to vector<1x8x128xi32>
      %495 = arith.addi %493, %494 : vector<1x8x128xi32>
      %c8_i32_136 = arith.constant 8 : i32
      %496 = vector.broadcast %c8_i32_136 : i32 to vector<1x8x128xi32>
      %497 = arith.shrsi %491, %496 : vector<1x8x128xi32>
      %c16777215_i32_137 = arith.constant 16777215 : i32
      %498 = vector.broadcast %c16777215_i32_137 : i32 to vector<1x8x128xi32>
      %499 = arith.andi %497, %498 : vector<1x8x128xi32>
      %500 = arith.sitofp %499 : vector<1x8x128xi32> to vector<1x8x128xf32>
      %cst_138 = arith.constant 5.000000e-01 : f32
      %501 = vector.broadcast %cst_138 : f32 to vector<1x8x128xf32>
      %502 = arith.addf %500, %501 : vector<1x8x128xf32>
      %cst_139 = arith.constant 5.96046448E-8 : f32
      %503 = vector.broadcast %cst_139 : f32 to vector<1x8x128xf32>
      %504 = arith.mulf %502, %503 : vector<1x8x128xf32>
      %505 = math.log %504 : vector<1x8x128xf32>
      %cst_140 = arith.constant 2.000000e+00 : f32
      %506 = vector.broadcast %cst_140 : f32 to vector<1x8x128xf32>
      %507 = arith.mulf %506, %505 : vector<1x8x128xf32>
      %508 = arith.subf %arg8, %507 : vector<1x8x128xf32>
      scf.yield %508 : vector<1x8x128xf32>
    }
    %c0_60 = arith.constant 0 : index
    %c0_61 = arith.constant 0 : index
    %c0_62 = arith.constant 0 : index
    %274 = vector.load %arg4[%c0_60, %c0_61, %c0_62] : memref<1x1x1xf32, #tpu.memory_space<vmem>>, vector<1x1x1xf32>
    %275 = vector.broadcast %274 : vector<1x1x1xf32> to vector<1x8x128xf32>
    %276 = arith.mulf %273, %275 : vector<1x8x128xf32>
    %277 = math.sqrt %276 : vector<1x8x128xf32>
    %c0_63 = arith.constant 0 : index
    %c0_64 = arith.constant 0 : index
    %c0_65 = arith.constant 0 : index
    %278 = vector.load %arg5[%c0_63, %c0_64, %c0_65] : memref<1x8x128xf32, #tpu.memory_space<vmem>>, vector<1x8x128xf32>
    %279 = arith.addf %278, %277 : vector<1x8x128xf32>
    %c0_66 = arith.constant 0 : index
    %c0_67 = arith.constant 0 : index
    %c0_68 = arith.constant 0 : index
    %280 = vector.load %arg6[%c0_66, %c0_67, %c0_68] : memref<1x8x128xf32, #tpu.memory_space<vmem>>, vector<1x8x128xf32>
    tpu.vector_store %arg6[%c0_66, %c0_67, %c0_68], %279 {strides = array<i32>} : memref<1x8x128xf32, #tpu.memory_space<vmem>>, vector<1x8x128xf32>,
    return
  }
  func.func @transform_0(%arg0: i32, %arg1: i32, %arg2: memref<1xi32, #tpu.memory_space<smem>>, %arg3: memref<8xi32, #tpu.memory_space<smem>>) -> (i32, i32, i32) {
    %c0_i32 = arith.constant 0 : i32
    %c0_i32_0 = arith.constant 0 : i32
    %c0_i32_1 = arith.constant 0 : i32
    return %arg0, %c0_i32, %c0_i32_0 : i32, i32, i32
  }
  func.func @transform_1(%arg0: i32, %arg1: i32, %arg2: memref<1xi32, #tpu.memory_space<smem>>, %arg3: memref<8xi32, #tpu.memory_space<smem>>) -> (i32, i32, i32) {
    %c0_i32 = arith.constant 0 : i32
    %c0_i32_0 = arith.constant 0 : i32
    return %arg0, %arg1, %c0_i32 : i32, i32, i32
  }
  func.func @transform_2(%arg0: i32, %arg1: i32, %arg2: memref<1xi32, #tpu.memory_space<smem>>, %arg3: memref<8xi32, #tpu.memory_space<smem>>) -> (i32, i32, i32) {
    %c0_i32 = arith.constant 0 : i32
    %c0_i32_0 = arith.constant 0 : i32
    return %arg0, %arg1, %c0_i32 : i32, i32, i32
  }
}

</mosaic_0001>

<llo_original>
// kernel: tpu_custom_call.1
$region0: #{tpu_custom_call.1}
  #allocation0 [shape = 'u32[]', space=smem, size = 0x4, offset = 0x4, fixed_abs, tag = 'smem constant byte address 0x4 - core index']
  #allocation1 [shape = 'u32[144,128]{1,0:T(1,128)}', space=vmem, size = 0x12000, scoped, tag = 'internal scratch']
  #allocation2 [shape = 's32[1]{0}', space=sflag, size = 0x4, scoped, tag = 'scoped memory for tpu_custom_call.1']
  #allocation3 [shape = 's32[1]{0:T(128)S(6)}', space=smem, size = 0x200, scoped, tag = 'prefetched SMEM operand 0']
  #allocation4 [shape = 'u8[512]{0}', space=smem, size = 0x200, scoped, tag = 'prefetched SMEM operand 1']
  %s0 = inlined_call_operand.<no memory space> [shape: s32[1], index: 0, kind: input, shape index: {}]
  %s1 = inlined_call_operand.vmem [shape: s32[8], index: 1, kind: input, shape index: {}]
  %s2 = inlined_call_operand.vmem [shape: f32[8,1,1], index: 2, kind: input, shape index: {}]
  %s3 = inlined_call_operand.hbm [shape: f32[8,8,128], index: 3, kind: input, shape index: {}]
  %s4 = inlined_call_operand.hbm [shape: f32[8,8,128], index: 4, kind: output, shape index: {}]
  %s5 = sld [smem:[#allocation0]]
  $region52: #{tpu_custom_call.1} parent=0
    _
  %s7 = ssub.s32 1, %s5
  %s8 = scalar_select 0, %s7, %s5
  %9 = sst [smem:[#allocation3]] %s0
  %s10 = sshll.u32 %s1, 4
  %s11 = int_to_ptr.vmem [resolvable:$true] %s10
  %13 = dma.vmem_to_smem %s11, 16, [#allocation4], [#allocation2]
  %14 = dma.done [#allocation2], 16
  %15 = sfence
  $region1: #{tpu_custom_call.1} parent=0
    #allocation5 [shape = 'u8[8192]{0}', space=vmem, size = 0x2000, scoped, tag = 'input window, operand 3']
    #allocation6 [shape = 's32[2]{0}', space=sflag, size = 0x8, scoped, tag = 'scoped memory for tpu_custom_call.1']
    #allocation7 [shape = 's32[2]{0}', space=sflag, size = 0x8, scoped, tag = 'scoped memory for tpu_custom_call.1']
    #allocation8 [shape = 'u8[8192]{0}', space=vmem, size = 0x2000, scoped, tag = 'output window, operand 0']
    %16 = vsyncpa [#allocation6], 0
    %s17 = scalar_lea.sflag [#allocation6], 1
    %18 = vsyncpa %s17, 0
    %19 = vsyncpa [#allocation7], 0
    %s20 = scalar_lea.sflag [#allocation7], 1
    %21 = vsyncpa %s20, 0
    loop: start=0, step=1, limit=10
    $region2: #{tpu_custom_call.1} parent=1 // loop_pre_header
      _
    $region3: #{tpu_custom_call.1} parent=1 // loop_header
      %s23 = sphi 0, %s27
      %p24 = scmp.ge.s32.totalorder %s23, 10
      %s30 = sphi 0, %s42
      %s31 = sphi 0, %s38
      %s32 = sphi 0, %s30
      %s33 = sphi 0, %s31
      %s34 = sphi 0, %s32
      %s35 = sphi 0, %s33
      %s45 = sphi 0, %s47
      %s48 = sphi 0, %s45
      %s49 = sphi 0, %s48
      %s65 = sphi 0, %s49
      %s73 = sphi 0, %s75
      %s76 = sphi 0, %s73
      %s77 = sphi 0, %s76
      %s93 = sphi 0, %s77
      %s101 = sphi 0, %s103
      %s104 = sphi 0, %s101
      %s105 = sphi 0, %s104
      %s121 = sphi 0, %s105
    $region4: #{tpu_custom_call.1} parent=1 // loop_header_branch
      %26 = sbr.rel (%p24) target = $region8
    $region5: #{tpu_custom_call.1} parent=1 // loop_body
      %s28 = ssub.s32 %s23, 1
      %s29 = ssub.s32 %s23, 2
      %s36 = sadd.s32 1, %s31
      %p37 = scmp.ge.s32.totalorder %s36, 1
      %s38 = scalar_select %p37, 0, %s36
      %s39 = sadd.s32 1, %s30
      %s40 = scalar_select %p37, %s39, %s30
      %p41 = scmp.ge.s32.totalorder %s40, 8
      %s42 = scalar_select %p41, 0, %s40
      %s43 = ssub.s32 %s30, %s42
      %p44 = scmp.eq.s32.totalorder %s43, 0
      %s46 = sadd.s32 %s45, 1
      %s47 = scalar_select %p44, %s45, %s46
      %p50 = pneg %p44
      %p51 = scmp.eq.s32.totalorder %s23, 7
      %p52 = por %p50, %p51
      %p53 = scmp.ne.s32.totalorder %s45, %s48
      %p54 = scmp.eq.s32.totalorder %s23, 0
      %p55 = por %p53, %p54
      %p56 = scmp.ne.s32.totalorder %s45, %s48
      %p57 = scmp.eq.s32.totalorder %s28, 7
      %p58 = por %p56, %p57
      %p59 = scmp.ne.s32.totalorder %s48, %s49
      %p60 = scmp.eq.s32.totalorder %s28, 0
      %p61 = por %p59, %p60
      %p62 = scmp.ne.s32.totalorder %s48, %s49
      %p63 = scmp.eq.s32.totalorder %s29, 7
      %p64 = por %p62, %p63
      %p66 = scmp.ne.s32.totalorder %s49, %s65
      %p67 = scmp.eq.s32.totalorder %s29, 0
      %p68 = por %p66, %p67
      %s69 = ssub.s32 %s30, %s42
      %s70 = ssub.s32 %s31, %s38
      %s71 = sor.u32 %s69, %s70
      %p72 = scmp.eq.s32.totalorder %s71, 0
      %s74 = sadd.s32 %s73, 1
      %s75 = scalar_select %p72, %s73, %s74
      %p78 = pneg %p72
      %p79 = scmp.eq.s32.totalorder %s23, 7
      %p80 = por %p78, %p79
      %p81 = scmp.ne.s32.totalorder %s73, %s76
      %p82 = scmp.eq.s32.totalorder %s23, 0
      %p83 = por %p81, %p82
      %p84 = scmp.ne.s32.totalorder %s73, %s76
      %p85 = scmp.eq.s32.totalorder %s28, 7
      %p86 = por %p84, %p85
      %p87 = scmp.ne.s32.totalorder %s76, %s77
      %p88 = scmp.eq.s32.totalorder %s28, 0
      %p89 = por %p87, %p88
      %p90 = scmp.ne.s32.totalorder %s76, %s77
      %p91 = scmp.eq.s32.totalorder %s29, 7
      %p92 = por %p90, %p91
      %p94 = scmp.ne.s32.totalorder %s77, %s93
      %p95 = scmp.eq.s32.totalorder %s29, 0
      %p96 = por %p94, %p95
      %s97 = ssub.s32 %s30, %s42
      %s98 = ssub.s32 %s31, %s38
      %s99 = sor.u32 %s97, %s98
      %p100 = scmp.eq.s32.totalorder %s99, 0
      %s102 = sadd.s32 %s101, 1
      %s103 = scalar_select %p100, %s101, %s102
      %p106 = pneg %p100
      %p107 = scmp.eq.s32.totalorder %s23, 7
      %p108 = por %p106, %p107
      %p109 = scmp.ne.s32.totalorder %s101, %s104
      %p110 = scmp.eq.s32.totalorder %s23, 0
      %p111 = por %p109, %p110
      %p112 = scmp.ne.s32.totalorder %s101, %s104
      %p113 = scmp.eq.s32.totalorder %s28, 7
      %p114 = por %p112, %p113
      %p115 = scmp.ne.s32.totalorder %s104, %s105
      %p116 = scmp.eq.s32.totalorder %s28, 0
      %p117 = por %p115, %p116
      %p118 = scmp.ne.s32.totalorder %s104, %s105
      %p119 = scmp.eq.s32.totalorder %s29, 7
      %p120 = por %p118, %p119
      %p122 = scmp.ne.s32.totalorder %s105, %s121
      %p123 = scmp.eq.s32.totalorder %s29, 0
      %p124 = por %p122, %p123
      %p125 = scmp.le.s32.totalorder 1, %s23
      %p126 = scmp.lt.s32.totalorder %s23, 9
      %p127 = pnand %p125, %p126
      %p128 = pneg %p127
      // Predicated region
      $region9: #{tpu_custom_call.1} parent=5 // pred_check
        _
      $region10: #{tpu_custom_call.1} parent=5 // pred_check_branch
        %130 = sbr.rel (%p127) target = $region12
      $region11: #{tpu_custom_call.1} parent=5 // pred_region
        %s131 = ssub.s32 %s23, 1
      $region12: #{tpu_custom_call.1} parent=5 // pred_fallthru
        _
      %p132 = scmp.lt.s32.totalorder %s23, 8
      // Predicated region
      $region13: #{tpu_custom_call.1} parent=5 // pred_check
        %p133 = pneg %p132
      $region14: #{tpu_custom_call.1} parent=5 // pred_check_branch
        %135 = sbr.rel (%p133) target = $region16
      $region15: #{tpu_custom_call.1} parent=5 // pred_region
        // Predicated region
        $region17: #{tpu_custom_call.1} parent=15 // pred_check
          %p136 = pneg %p55
        $region18: #{tpu_custom_call.1} parent=15 // pred_check_branch
          %138 = sbr.rel (%p136) target = $region20
        $region19: #{tpu_custom_call.1} parent=15 // pred_region
          %p139 = scmp.lt.s32.totalorder %s30, 7
          %s140 = scalar_select %p139, %s30, 7
          %s141 = scalar_lea.vmem %s2, %s140
        $region20: #{tpu_custom_call.1} parent=15 // pred_fallthru
          _
        // Predicated region
        $region21: #{tpu_custom_call.1} parent=15 // pred_check
          %p142 = pneg %p83
        $region22: #{tpu_custom_call.1} parent=15 // pred_check_branch
          %144 = sbr.rel (%p142) target = $region24
        $region23: #{tpu_custom_call.1} parent=15 // pred_region
          %s145 = sand.u32 %s73, 1
          %s146 = scalar_lea.sflag [#allocation6], %s145
          %s147 = sand.u32 %s73, 1
          %s148 = smul.addr %s147, 8
          %s149 = scalar_lea.vmem [#allocation5], %s148
          %s151 = ssub.s32 128, 128
          %152 = vsyncadd %s146, %s151
          %s153 = sadd.s32 %s31, %s30
          %s154 = smul.addr %s153, 128
          %s155 = scalar_lea.hbm %s3, %s154
          %s157 = sshll.u32 %s149, 4
          %s158 = int_to_ptr.vmem [resolvable:$true] %s157
          %160 = dma.hbm_to_vmem [thread:$0]  %s155, 128, %s158, %s146
        $region24: #{tpu_custom_call.1} parent=15 // pred_fallthru
          _
      $region16: #{tpu_custom_call.1} parent=5 // pred_fallthru
        _
      %p161 = scmp.le.s32.totalorder 1, %s23
      %p162 = scmp.lt.s32.totalorder %s23, 9
      %p163 = pnand %p161, %p162
      %p164 = pneg %p163
      // Predicated region
      $region25: #{tpu_custom_call.1} parent=5 // pred_check
        _
      $region26: #{tpu_custom_call.1} parent=5 // pred_check_branch
        %166 = sbr.rel (%p163) target = $region28
      $region27: #{tpu_custom_call.1} parent=5 // pred_region
        %s167 = ssub.s32 %s23, 1
        %s168 = sand.u32 %s76, 1
        %s169 = scalar_lea.sflag [#allocation6], %s168
        %s170 = sand.u32 %s76, 1
        %s171 = smul.addr %s170, 8
        %s172 = scalar_lea.vmem [#allocation5], %s171
        // Predicated region
        $region29: #{tpu_custom_call.1} parent=27 // pred_check
          %p173 = pneg %p89
        $region30: #{tpu_custom_call.1} parent=27 // pred_check_branch
          %175 = sbr.rel (%p173) target = $region32
        $region31: #{tpu_custom_call.1} parent=27 // pred_region
          %176 = dma.done %s169, 128
        $region32: #{tpu_custom_call.1} parent=27 // pred_fallthru
          _
        %p177 = scmp.lt.s32.totalorder %s32, 7
        %s178 = scalar_select %p177, %s32, 7
        %s179 = scalar_lea.vmem %s2, %s178
        %p180 = pneg %p61
        %p181 = pneg %p58
        %s182 = sand.u32 %s76, 1
        %s183 = scalar_lea.sflag [#allocation6], %s182
        %s184 = sand.u32 %s76, 1
        %s185 = smul.addr %s184, 8
        %s186 = scalar_lea.vmem [#allocation5], %s185
        %p187 = pneg %p89
        %p188 = pneg %p86
        %p189 = pneg %p117
        %p190 = pneg %p114
        %s191 = sand.u32 %s104, 1
        %s192 = scalar_lea.sflag [#allocation7], %s191
        %s193 = sand.u32 %s104, 1
        %s194 = smul.addr %s193, 8
        %s195 = scalar_lea.vmem [#allocation8], %s194
        %p196 = scmp.lt.s32.totalorder %s32, 7
        %s197 = scalar_select %p196, %s32, 7
        %s198 = scalar_lea.vmem %s2, %s197
        %s199 = sld [smem:[#allocation4 + %s32]]
        %v200 = vlaneseq
        %v201 = vshrl.u32 %v200, 7
        %v202 = vlaneseq
        %v203 = vand.u32 %v202, 127
        %s204 = sadd.s32 %s32, %s33
        %s205 = smul.u32 %s204, 1024
        %v206 = vmul.u32 %v201, 128
        %v207 = vstv %s205
        %v208 = vadd.s32 %v207, %v206
        %v209 = vadd.s32 %v208, %v203
        %s210 = sld [smem:[#allocation3]]
        %s211 = sxor.u32 %s210, 608135816
        %v212 = vstv %s210
        %v213 = vadd.s32 %v209, %v212
        %v214 = vstv %s211
        %v215 = vadd.s32 %v213, %v214
        %s216 = sshll.u32 %s211, 13
        %s217 = sshra.s32 %s211, 19
        %s218 = sand.u32 %s217, 8191
        %s219 = sor.u32 %s216, %s218
        %v220 = vstv %s219
        %v221 = vxor.u32 %v220, %v215
        %v222 = vadd.s32 %v215, %v221
        %v223 = vshll.u32 %v221, 15
        %v224 = vshra.s32 %v221, 17
        %v225 = vand.u32 %v224, 32767
        %v226 = vor.u32 %v223, %v225
        %v227 = vxor.u32 %v226, %v222
        %v228 = vadd.s32 %v222, %v227
        %v229 = vshll.u32 %v227, 26
        %v230 = vshra.s32 %v227, 6
        %v231 = vand.u32 %v230, 67108863
        %v232 = vor.u32 %v229, %v231
        %v233 = vxor.u32 %v232, %v228
        %v234 = vadd.s32 %v228, %v233
        %v235 = vshll.u32 %v233, 6
        %v236 = vshra.s32 %v233, 26
        %v237 = vand.u32 %v236, 63
        %v238 = vor.u32 %v235, %v237
        %v239 = vxor.u32 %v238, %v234
        %v240 = vadd.s32 %v234, %v214
        %v241 = vadd.s32 %v239, 1072591186
        %v242 = vadd.s32 %v241, 1
        %v243 = vadd.s32 %v240, %v242
        %v244 = vshll.u32 %v242, 17
        %v245 = vshra.s32 %v242, 15
        %v246 = vand.u32 %v245, 131071
        %v247 = vor.u32 %v244, %v246
        %v248 = vxor.u32 %v247, %v243
        %v249 = vadd.s32 %v243, %v248
        %v250 = vshll.u32 %v248, 29
        %v251 = vshra.s32 %v248, 3
        %v252 = vand.u32 %v251, 536870911
        %v253 = vor.u32 %v250, %v252
        %v254 = vxor.u32 %v253, %v249
        %v255 = vadd.s32 %v249, %v254
        %v256 = vshll.u32 %v254, 16
        %v257 = vshra.s32 %v254, 16
        %v258 = vand.u32 %v257, 65535
        %v259 = vor.u32 %v256, %v258
        %v260 = vxor.u32 %v259, %v255
        %v261 = vadd.s32 %v255, %v260
        %v262 = vshll.u32 %v260, 24
        %v263 = vshra.s32 %v260, 8
        %v264 = vand.u32 %v263, 16777215
        %v265 = vor.u32 %v262, %v264
        %v266 = vxor.u32 %v265, %v261
        %v267 = vadd.s32 %v261, 1072591186
        %v268 = vadd.s32 %v266, %v212
        %v269 = vadd.s32 %v268, 2
        %v270 = vadd.s32 %v267, %v269
        %v271 = vshll.u32 %v269, 13
        %v272 = vshra.s32 %v269, 19
        %v273 = vand.u32 %v272, 8191
        %v274 = vor.u32 %v271, %v273
        %v275 = vxor.u32 %v274, %v270
        %v276 = vadd.s32 %v270, %v275
        %v277 = vshll.u32 %v275, 15
        %v278 = vshra.s32 %v275, 17
        %v279 = vand.u32 %v278, 32767
        %v280 = vor.u32 %v277, %v279
        %v281 = vxor.u32 %v280, %v276
        %v282 = vadd.s32 %v276, %v281
        %v283 = vshll.u32 %v281, 26
        %v284 = vshra.s32 %v281, 6
        %v285 = vand.u32 %v284, 67108863
        %v286 = vor.u32 %v283, %v285
        %v287 = vxor.u32 %v286, %v282
        %v288 = vadd.s32 %v282, %v287
        %v289 = vshll.u32 %v287, 6
        %v290 = vshra.s32 %v287, 26
        %v291 = vand.u32 %v290, 63
        %v292 = vor.u32 %v289, %v291
        %v293 = vxor.u32 %v292, %v288
        %v294 = vadd.s32 %v288, %v212
        %v295 = vadd.s32 %v293, %v214
        %v296 = vadd.s32 %v295, 3
        %v297 = vadd.s32 %v294, %v296
        %v298 = vshll.u32 %v296, 17
        %v299 = vshra.s32 %v296, 15
        %v300 = vand.u32 %v299, 131071
        %v301 = vor.u32 %v298, %v300
        %v302 = vxor.u32 %v301, %v297
        %v303 = vadd.s32 %v297, %v302
        %v304 = vshll.u32 %v302, 29
        %v305 = vshra.s32 %v302, 3
        %v306 = vand.u32 %v305, 536870911
        %v307 = vor.u32 %v304, %v306
        %v308 = vxor.u32 %v307, %v303
        %v309 = vadd.s32 %v303, %v308
        %v310 = vshll.u32 %v308, 16
        %v311 = vshra.s32 %v308, 16
        %v312 = vand.u32 %v311, 65535
        %v313 = vor.u32 %v310, %v312
        %v314 = vxor.u32 %v313, %v309
        %v315 = vadd.s32 %v309, %v314
        %v316 = vshll.u32 %v314, 24
        %v317 = vshra.s32 %v314, 8
        %v318 = vand.u32 %v317, 16777215
        %v319 = vor.u32 %v316, %v318
        %v320 = vxor.u32 %v319, %v315
        %v321 = vadd.s32 %v315, %v214
        %v322 = vadd.s32 %v320, 1072591186
        %v323 = vadd.s32 %v322, 4
        %v324 = vadd.s32 %v321, %v323
        %v325 = vshll.u32 %v323, 13
        %v326 = vshra.s32 %v323, 19
        %v327 = vand.u32 %v326, 8191
        %v328 = vor.u32 %v325, %v327
        %v329 = vxor.u32 %v328, %v324
        %v330 = vadd.s32 %v324, %v329
        %v331 = vshll.u32 %v329, 15
        %v332 = vshra.s32 %v329, 17
        %v333 = vand.u32 %v332, 32767
        %v334 = vor.u32 %v331, %v333
        %v335 = vxor.u32 %v334, %v330
        %v336 = vadd.s32 %v330, %v335
        %v337 = vshll.u32 %v335, 26
        %v338 = vshra.s32 %v335, 6
        %v339 = vand.u32 %v338, 67108863
        %v340 = vor.u32 %v337, %v339
        %v341 = vxor.u32 %v340, %v336
        %v342 = vadd.s32 %v336, %v341
        %v343 = vshll.u32 %v341, 6
        %v344 = vshra.s32 %v341, 26
        %v345 = vand.u32 %v344, 63
        %v346 = vor.u32 %v343, %v345
        %v347 = vxor.u32 %v346, %v342
        %v348 = vadd.s32 %v342, 1072591186
        %v349 = vadd.s32 %v347, %v212
        %v350 = vadd.s32 %v349, 5
        %v351 = vshra.s32 %v348, 8
        %v352 = vand.u32 %v351, 16777215
        %v353 = vcvt.s32.f32 %v352
        %v354 = vadd.f32 %v353, 0.5
        %v355 = vmul.f32 %v354, 5.9604645e-08
        %v356 = vshra.s32 %v350, 8
        %v357 = vand.u32 %v356, 16777215
        %v358 = vcvt.s32.f32 %v357
        %v359 = vadd.f32 %v358, 0.5
        %v360 = vmul.f32 %v359, 5.9604645e-08
        %v361 = vmul.f32 %v360, 1.5707964
        %v362 = vmul.f32 %v361, %v361
        %v363 = vmul.f32 %v362, -2.5052108e-08
        %v364 = vadd.f32 %v363, 2.7557319e-06
        %v365 = vmul.f32 %v364, %v362
        %v366 = vadd.f32 %v365, -0.0001984127
        %v367 = vmul.f32 %v366, %v362
        %v368 = vadd.f32 %v367, 0.008333334
        %v369 = vmul.f32 %v368, %v362
        %v370 = vadd.f32 %v369, -0.16666667
        %v371 = vmul.f32 %v370, %v362
        %v372 = vadd.f32 %v371, 1.0
        %v373 = vmul.f32 %v361, %v372
        %v374 = vlog2.pop %v355
        %v375 = vmul.f32 %v374, 0.6931472
        %v376 = vmul.f32 %v375, -2.0
        %v377 = vmul.f32 %v373, %v373
        %v378 = vmul.f32 %v376, %v377
        // While loop
        $region33: #{tpu_custom_call.1} parent=27 // loop_pre_header
          _
        $region34: #{tpu_custom_call.1} parent=27 // loop_header
          %s380 = sphi 0, %s382
          %p381 = scmp.ge.s32.totalorder %s380, %s199
          %v385 = vphi %v378, %v526
        $region35: #{tpu_custom_call.1} parent=27 // loop_header_branch
          %384 = sbr.rel (%p381) target = $region39
        $region36: #{tpu_custom_call.1} parent=27 // loop_body
          %s386 = sadd.s32 %s380, 1
          %s387 = sadd.s32 %s386, %s211
          %v388 = vstv %s387
          %v389 = vadd.s32 %v213, %v388
          %s390 = sshll.u32 %s387, 13
          %s391 = sshra.s32 %s387, 19
          %s392 = sand.u32 %s391, 8191
          %s393 = sor.u32 %s390, %s392
          %v394 = vstv %s393
          %v395 = vxor.u32 %v394, %v389
          %v396 = vadd.s32 %v389, %v395
          %v397 = vshll.u32 %v395, 15
          %v398 = vshra.s32 %v395, 17
          %v399 = vand.u32 %v398, 32767
          %v400 = vor.u32 %v397, %v399
          %v401 = vxor.u32 %v400, %v396
          %v402 = vadd.s32 %v396, %v401
          %v403 = vshll.u32 %v401, 26
          %v404 = vshra.s32 %v401, 6
          %v405 = vand.u32 %v404, 67108863
          %v406 = vor.u32 %v403, %v405
          %v407 = vxor.u32 %v406, %v402
          %v408 = vadd.s32 %v402, %v407
          %v409 = vshll.u32 %v407, 6
          %v410 = vshra.s32 %v407, 26
          %v411 = vand.u32 %v410, 63
          %v412 = vor.u32 %v409, %v411
          %v413 = vxor.u32 %v412, %v408
          %v414 = vadd.s32 %v408, %v214
          %v415 = vadd.s32 %v413, 1072591186
          %v416 = vadd.s32 %v415, 1
          %v417 = vadd.s32 %v414, %v416
          %v418 = vshll.u32 %v416, 17
          %v419 = vshra.s32 %v416, 15
          %v420 = vand.u32 %v419, 131071
          %v421 = vor.u32 %v418, %v420
          %v422 = vxor.u32 %v421, %v417
          %v423 = vadd.s32 %v417, %v422
          %v424 = vshll.u32 %v422, 29
          %v425 = vshra.s32 %v422, 3
          %v426 = vand.u32 %v425, 536870911
          %v427 = vor.u32 %v424, %v426
          %v428 = vxor.u32 %v427, %v423
          %v429 = vadd.s32 %v423, %v428
          %v430 = vshll.u32 %v428, 16
          %v431 = vshra.s32 %v428, 16
          %v432 = vand.u32 %v431, 65535
          %v433 = vor.u32 %v430, %v432
          %v434 = vxor.u32 %v433, %v429
          %v435 = vadd.s32 %v429, %v434
          %v436 = vshll.u32 %v434, 24
          %v437 = vshra.s32 %v434, 8
          %v438 = vand.u32 %v437, 16777215
          %v439 = vor.u32 %v436, %v438
          %v440 = vxor.u32 %v439, %v435
          %v441 = vadd.s32 %v435, 1072591186
          %v442 = vadd.s32 %v440, %v212
          %v443 = vadd.s32 %v442, 2
          %v444 = vadd.s32 %v441, %v443
          %v445 = vshll.u32 %v443, 13
          %v446 = vshra.s32 %v443, 19
          %v447 = vand.u32 %v446, 8191
          %v448 = vor.u32 %v445, %v447
          %v449 = vxor.u32 %v448, %v444
          %v450 = vadd.s32 %v444, %v449
          %v451 = vshll.u32 %v449, 15
          %v452 = vshra.s32 %v449, 17
          %v453 = vand.u32 %v452, 32767
          %v454 = vor.u32 %v451, %v453
          %v455 = vxor.u32 %v454, %v450
          %v456 = vadd.s32 %v450, %v455
          %v457 = vshll.u32 %v455, 26
          %v458 = vshra.s32 %v455, 6
          %v459 = vand.u32 %v458, 67108863
          %v460 = vor.u32 %v457, %v459
          %v461 = vxor.u32 %v460, %v456
          %v462 = vadd.s32 %v456, %v461
          %v463 = vshll.u32 %v461, 6
          %v464 = vshra.s32 %v461, 26
          %v465 = vand.u32 %v464, 63
          %v466 = vor.u32 %v463, %v465
          %v467 = vxor.u32 %v466, %v462
          %v468 = vadd.s32 %v462, %v212
          %v469 = vadd.s32 %v467, %v214
          %v470 = vadd.s32 %v469, 3
          %v471 = vadd.s32 %v468, %v470
          %v472 = vshll.u32 %v470, 17
          %v473 = vshra.s32 %v470, 15
          %v474 = vand.u32 %v473, 131071
          %v475 = vor.u32 %v472, %v474
          %v476 = vxor.u32 %v475, %v471
          %v477 = vadd.s32 %v471, %v476
          %v478 = vshll.u32 %v476, 29
          %v479 = vshra.s32 %v476, 3
          %v480 = vand.u32 %v479, 536870911
          %v481 = vor.u32 %v478, %v480
          %v482 = vxor.u32 %v481, %v477
          %v483 = vadd.s32 %v477, %v482
          %v484 = vshll.u32 %v482, 16
          %v485 = vshra.s32 %v482, 16
          %v486 = vand.u32 %v485, 65535
          %v487 = vor.u32 %v484, %v486
          %v488 = vxor.u32 %v487, %v483
          %v489 = vadd.s32 %v483, %v488
          %v490 = vshll.u32 %v488, 24
          %v491 = vshra.s32 %v488, 8
          %v492 = vand.u32 %v491, 16777215
          %v493 = vor.u32 %v490, %v492
          %v494 = vxor.u32 %v493, %v489
          %v495 = vadd.s32 %v489, %v214
          %v496 = vadd.s32 %v494, 1072591186
          %v497 = vadd.s32 %v496, 4
          %v498 = vadd.s32 %v495, %v497
          %v499 = vshll.u32 %v497, 13
          %v500 = vshra.s32 %v497, 19
          %v501 = vand.u32 %v500, 8191
          %v502 = vor.u32 %v499, %v501
          %v503 = vxor.u32 %v502, %v498
          %v504 = vadd.s32 %v498, %v503
          %v505 = vshll.u32 %v503, 15
          %v506 = vshra.s32 %v503, 17
          %v507 = vand.u32 %v506, 32767
          %v508 = vor.u32 %v505, %v507
          %v509 = vxor.u32 %v508, %v504
          %v510 = vadd.s32 %v504, %v509
          %v511 = vshll.u32 %v509, 26
          %v512 = vshra.s32 %v509, 6
          %v513 = vand.u32 %v512, 67108863
          %v514 = vor.u32 %v511, %v513
          %v515 = vxor.u32 %v514, %v510
          %v516 = vadd.s32 %v510, %v515
          %v517 = vadd.s32 %v516, 1072591186
          %v518 = vshra.s32 %v517, 8
          %v519 = vand.u32 %v518, 16777215
          %v520 = vcvt.s32.f32 %v519
          %v521 = vadd.f32 %v520, 0.5
          %v522 = vmul.f32 %v521, 5.9604645e-08
          %v523 = vlog2.pop %v522
          %v524 = vmul.f32 %v523, 0.6931472
          %v525 = vmul.f32 %v524, 2.0
          %v526 = vsub.f32 %v385, %v525
        $region37: #{tpu_custom_call.1} parent=27 // loop_footer
          %s382 = sadd.s32 %s380, 1
        $region38: #{tpu_custom_call.1} parent=27 // loop_footer_branch
          %379 = sbr.rel target = $region34
        $region39: #{tpu_custom_call.1} parent=27 // loop_exit
          _
        %v527 = vld [vmem:[%s198] sm:$0x1]
        %v529 = vlaneseq
        %v530 = vshrl.u32 %v529, 7
        %v531 = vsub.s32 0, %v530
        %v532 = vrot.slane %v527, %v531
        %533 = vset.pattern.permute.xlu0 0
        %534 = vperm.xlu0 %533, %v532
        %v535 = vpop.permute.xlu0 %534
        %v537 = vmul.f32 %v385, %v535
        %v538 = vrsqrt.pop %v537
        %v539 = vmul.f32 %v537, %v538
        %vm540 = vcmp.eq.f32.partialorder %v537, inf
        %v541 = vsel %vm540, %v537, %v539
        %vm542 = vcmp.eq.f32.partialorder %v537, 0.0
        %v543 = vand.u32 %v537, 2147483648
        %v544 = vsel %vm542, %v543, %v541
        %v545 = vld [vmem:[%s172] sm:$0xff]
        %v546 = vadd.f32 %v545, %v544
        %547 = vst [vmem:[%s195] sm:$0xff] %v546
        %s548 = sand.u32 %s104, 1
        %s549 = scalar_lea.sflag [#allocation7], %s548
        %s550 = sand.u32 %s104, 1
        %s551 = smul.addr %s550, 8
        %s552 = scalar_lea.vmem [#allocation8], %s551
        // Predicated region
        $region40: #{tpu_custom_call.1} parent=27 // pred_check
          %p553 = pneg %p114
        $region41: #{tpu_custom_call.1} parent=27 // pred_check_branch
          %555 = sbr.rel (%p553) target = $region43
        $region42: #{tpu_custom_call.1} parent=27 // pred_region
          %s557 = ssub.s32 128, 128
          %558 = vsyncadd %s549, %s557
          %s559 = sadd.s32 %s33, %s32
          %s560 = smul.addr %s559, 128
          %s561 = scalar_lea.hbm %s4, %s560
          %s563 = sshll.u32 %s552, 4
          %s564 = int_to_ptr.vmem [resolvable:$true] %s563
          %566 = dma.vmem_to_hbm [thread:$0]  %s564, 128, %s561, %s549
        $region43: #{tpu_custom_call.1} parent=27 // pred_fallthru
          _
      $region28: #{tpu_custom_call.1} parent=5 // pred_fallthru
        _
      %p567 = scmp.le.s32.totalorder 2, %s23
      // Predicated region
      $region44: #{tpu_custom_call.1} parent=5 // pred_check
        %p568 = pneg %p567
      $region45: #{tpu_custom_call.1} parent=5 // pred_check_branch
        %570 = sbr.rel (%p568) target = $region47
      $region46: #{tpu_custom_call.1} parent=5 // pred_region
        %s571 = ssub.s32 %s23, 2
        // Predicated region
        $region48: #{tpu_custom_call.1} parent=46 // pred_check
          %p572 = pneg %p120
        $region49: #{tpu_custom_call.1} parent=46 // pred_check_branch
          %574 = sbr.rel (%p572) target = $region51
        $region50: #{tpu_custom_call.1} parent=46 // pred_region
          %s575 = sand.u32 %s105, 1
          %s576 = scalar_lea.sflag [#allocation7], %s575
          %s577 = sand.u32 %s105, 1
          %s578 = smul.addr %s577, 8
          %s579 = scalar_lea.vmem [#allocation8], %s578
          %580 = dma.done %s576, 128
        $region51: #{tpu_custom_call.1} parent=46 // pred_fallthru
          _
      $region47: #{tpu_custom_call.1} parent=5 // pred_fallthru
        _
    $region6: #{tpu_custom_call.1} parent=1 // loop_footer
      %s27 = sadd.s32 1, %s23
    $region7: #{tpu_custom_call.1} parent=1 // loop_footer_branch
      %22 = sbr.rel target = $region3
    $region8: #{tpu_custom_call.1} parent=1 // loop_exit
      _
    %581 = vsyncpa [#allocation6], 1
    %s582 = scalar_lea.sflag [#allocation6], 1
    %583 = vsyncpa %s582, 1
    %584 = vsyncpa [#allocation7], 1
    %s585 = scalar_lea.sflag [#allocation7], 1
    %586 = vsyncpa %s585, 1

</llo_original>
